<compile_context>
chip_gen: v6e
topology: v6e:2x2x1
jax: 0.10.0
libtpu: 0.0.40
codegen_flags: <defaults>
</compile_context>

<pallas_src>
import functools

import jax
import jax.numpy as jnp
from jax import lax
from jax.experimental import pallas as pl
from jax.experimental.pallas import tpu as pltpu

IGNORE_INDEX = -100

_MAX_TILE_V = 4096               # lane-axis block cap (multiple of 128)
_MAX_TILE_M = 1024               # token-axis block cap (multiple of 8)


def _vmem_capacity_bytes():
    try:
        return int(pltpu.get_tpu_info().vmem_capacity_bytes)
    except Exception:
        # Unknown generation: assume the smallest (v7x-sized) VMEM; the
        # resulting tiling is safe (and near-roofline) on every generation.
        return 64 * 1024 * 1024


def _hw_policy():
    """(target block bytes of the f32-widened logits tile, vmem limit)."""
    if _vmem_capacity_bytes() >= 100 * 1024 * 1024:      # v5e / v6e (128 MiB)
        return 8 * 1024 * 1024, 64 * 1024 * 1024
    return 4 * 1024 * 1024, 40 * 1024 * 1024             # v7x (64 MiB)


def _choose_tile_v(vocab, tile_v):
    """Returns (tile_v, n_vocab_tiles, tail_mask_needed) as Python ints/bool."""
    if tile_v is None:
        if vocab <= _MAX_TILE_V:
            tile_v = vocab                # single tile; lane dim == full dim
        else:
            # Prefer a large multiple-of-128 divisor of V so no tail mask is
            # ever needed; fall back to the cap + last-tile-only mask.
            tile_v = 0
            d = (_MAX_TILE_V // 128) * 128
            while d >= 2048:
                if vocab % d == 0:
                    tile_v = d
                    break
                d -= 128
            if tile_v == 0:
                tile_v = _MAX_TILE_V
    kv = -(-vocab // tile_v)
    return tile_v, kv, (kv * tile_v != vocab)


def _choose_tile_m(n_rows, tile_v, block_bytes, tile_m):
    if tile_m is None:
        rows = block_bytes // max(1, tile_v * 4)     # size by the f32-widened tile
        tile_m = max(8, min(_MAX_TILE_M, (rows // 8) * 8))
    if n_rows >= 8:
        # Guarantee >= 2 token tiles (when rows allow) so the "parallel" token
        # axis shards across both TensorCores on v7x; on 1-TC chips the extra
        # grid step costs ~0.35us and is noise.
        cap = 8 * (-(-n_rows // 16))
        tile_m = min(tile_m, cap)
    return max(8, (tile_m // 8) * 8)


def _ce_kernel(logits_ref, labels_ref, out_ref, m_sc, l_sc, p_sc,
               *, vocab, tile_v, n_vocab_tiles, tail_mask):
    """Online log-sum-exp cross entropy over a (tile_m, tile_v) logits block."""
    j = pl.program_id(1)                       # vocab tile (reduction axis, last)

    @pl.when(j == 0)
    def _():
        m_sc[...] = jnp.full_like(m_sc, -jnp.inf)
        l_sc[...] = jnp.zeros_like(l_sc)
        p_sc[...] = jnp.zeros_like(p_sc)

    x = logits_ref[...].astype(jnp.float32)    # (tile_m, tile_v)
    lab = labels_ref[...]                      # (tile_m, 1) int32

    # Local column index; shift the label into this tile's frame instead of
    # adding j*tile_v to every element (saves a full-tile int add).
    col = lax.broadcasted_iota(jnp.int32, x.shape, 1)
    lab_local = lab - j * tile_v               # (tile_m, 1)

    if tail_mask:                              # static: only when kv*tile_v > V
        # Only the last vocab tile can overhang V; mask there only.
        limit = vocab - j * tile_v
        x = lax.cond(j == n_vocab_tiles - 1,
                     lambda v: jnp.where(col < limit, v, -jnp.inf),
                     lambda v: v,
                     x)

    # Logit at the label index (IGNORE_INDEX rows never match any column).
    p_sc[...] += jnp.sum(jnp.where(col == lab_local, x, 0.0),
                         axis=-1, keepdims=True)

    # Online log-sum-exp accumulators (strictly per row).
    m_prev = m_sc[...]
    m_new = jnp.maximum(m_prev, jnp.max(x, axis=-1, keepdims=True))
    l_sc[...] = (l_sc[...] * jnp.exp(m_prev - m_new)
                 + jnp.sum(jnp.exp(x - m_new), axis=-1, keepdims=True))
    m_sc[...] = m_new

    @pl.when(j == n_vocab_tiles - 1)
    def _():
        # INVARIANT: everything above is row-wise, so garbage (possibly NaN)
        # from out-of-bounds token rows of the trailing block stays in those
        # rows; their labels are padded to IGNORE_INDEX and are zeroed here
        # BEFORE the cross-row sum.  Do not add cross-row ops above this mask.
        valid = lab != IGNORE_INDEX
        nll = m_sc[...] + jnp.log(l_sc[...]) - p_sc[...]
        nll = jnp.where(valid, nll, 0.0)
        tile_sum = jnp.sum(nll, keepdims=True)               # (1, 1)
        out_ref[...] = jnp.broadcast_to(tile_sum, out_ref.shape)


@functools.partial(jax.jit, static_argnames=("tile_m", "tile_v"))
def lm_loss(logits, labels, tile_m=None, tile_v=None):
    """Pallas implementation of LMLoss.forward(logits, labels)."""
    B, S, V = logits.shape
    labels = labels.astype(jnp.int32)

    # Shift on the label side only: the target for logits[:, t] is
    # labels[:, t + 1]; the last position per sequence has no target.
    shifted = jnp.concatenate(
        [labels[:, 1:], jnp.full((B, 1), IGNORE_INDEX, jnp.int32)], axis=1)

    logits2d = logits.reshape(B * S, V)        # contiguous reshape: no HBM copy
    labels2d = shifted.reshape(B * S, 1)
    n = B * S
    itemsize = jnp.dtype(logits.dtype).itemsize

    block_bytes, vmem_limit = _hw_policy()
    tv, kv, tail_mask = _choose_tile_v(V, tile_v)
    tm = _choose_tile_m(n, tv, block_bytes, tile_m)

    t_tiles = -(-n // tm)
    n_total = t_tiles * tm

    # Pad only the (tiny) labels; padded rows carry IGNORE_INDEX so any
    # out-of-bounds logits rows in the trailing block are masked out.
    labels_p = jnp.pad(labels2d, ((0, n_total - n), (0, 0)),
                       constant_values=IGNORE_INDEX)
    if n < tm:                                 # tiny-input fallback (n < 8)
        logits2d = jnp.pad(logits2d, ((0, tm - n), (0, 0)))

    kernel = functools.partial(_ce_kernel, vocab=V, tile_v=tv,
                               n_vocab_tiles=kv, tail_mask=tail_mask)

    cost = pl.CostEstimate(
        flops=6 * n * V,
        transcendentals=n * V,
        bytes_accessed=n * V * itemsize + n * 4 + t_tiles * 8 * 128 * 4)

    partial_sums = pl.pallas_call(
        kernel,
        out_shape=jax.ShapeDtypeStruct((t_tiles * 8, 128), jnp.float32),
        grid_spec=pltpu.PrefetchScalarGridSpec(
            num_scalar_prefetch=0,
            grid=(t_tiles, kv),
            in_specs=[
                pl.BlockSpec((tm, tv), lambda i, j: (i, j)),
                pl.BlockSpec((tm, 1), lambda i, j: (i, 0)),
            ],
            out_specs=pl.BlockSpec((8, 128), lambda i, j: (i, 0)),
            scratch_shapes=[pltpu.VMEM((tm, 1), jnp.float32)] * 3,
        ),
        compiler_params=pltpu.CompilerParams(
            dimension_semantics=("parallel", "arbitrary"),
            vmem_limit_bytes=vmem_limit),
        cost_estimate=cost,
    )(logits2d, labels_p)

    total = jnp.sum(partial_sums[::8, 0])                  # one sum per token tile
    count = jnp.sum(shifted != IGNORE_INDEX)               # exact integer count
    # NOTE: if every token is ignored this returns 0/0 = NaN, matching PyTorch.
    return total / count.astype(jnp.float32)


def _reference_lm_loss(logits, labels):
    """Pure-JAX reference (matches nn.CrossEntropyLoss semantics)."""
    V = logits.shape[-1]
    sl = logits[:, :-1, :].reshape(-1, V).astype(jnp.float32)
    lb = labels[:, 1:].reshape(-1).astype(jnp.int32)
    logp = jax.nn.log_softmax(sl, axis=-1)
    valid = lb != IGNORE_INDEX
    safe_lb = jnp.where(valid, lb, 0)
    nll = -jnp.take_along_axis(logp, safe_lb[:, None], axis=-1)[:, 0]
    nll = jnp.where(valid, nll, 0.0)
    return jnp.sum(nll) / jnp.sum(valid.astype(jnp.float32))


if __name__ == "__main__":
    key = jax.random.PRNGKey(0)
    k1, k2, k3, k4, k5, k6 = jax.random.split(key, 6)

    # Test 1: clean shapes, single vocab tile, two token tiles (megacore path).
    B, S, V = 2, 8, 128
    logits = jax.random.normal(k1, (B, S, V), dtype=jnp.float32)
    labels = jax.random.randint(k2, (B, S), 0, V, dtype=jnp.int32)
    loss = lm_loss(logits, labels)
    jax.block_until_ready(loss)
    ref = _reference_lm_loss(logits, labels)
    assert jnp.allclose(loss, ref, rtol=1e-5, atol=1e-5), (loss, ref)

    # Test 2: token-row padding, IGNORE_INDEX labels, multi-vocab-tile
    # online-logsumexp path with an exactly-dividing tile_v (no tail mask).
    B, S, V = 2, 7, 256
    logits = jax.random.normal(k3, (B, S, V), dtype=jnp.float32)
    labels = jax.random.randint(k4, (B, S), 0, V, dtype=jnp.int32)
    labels = labels.at[0, 3].set(IGNORE_INDEX)
    loss2 = lm_loss(logits, labels, tile_v=128)
    jax.block_until_ready(loss2)
    ref2 = _reference_lm_loss(logits, labels)
    assert jnp.allclose(loss2, ref2, rtol=1e-5, atol=1e-5), (loss2, ref2)

    # Test 3: vocab not a multiple of the tile -> last-vocab-tile-only mask.
    B, S, V = 2, 8, 200
    logits = jax.random.normal(k5, (B, S, V), dtype=jnp.float32)
    labels = jax.random.randint(k6, (B, S), 0, V, dtype=jnp.int32)
    loss3 = lm_loss(logits, labels, tile_v=128)
    jax.block_until_ready(loss3)
    ref3 = _reference_lm_loss(logits, labels)
    assert jnp.allclose(loss3, ref3, rtol=1e-5, atol=1e-5), (loss3, ref3)

    # Test 4: bf16 logits path.
    logits_bf16 = jax.random.normal(k5, (2, 8, 256), dtype=jnp.bfloat16)
    labels4 = jax.random.randint(k6, (2, 8), 0, 256, dtype=jnp.int32)
    loss4 = lm_loss(logits_bf16, labels4, tile_v=128)
    jax.block_until_ready(loss4)
    ref4 = _reference_lm_loss(logits_bf16, labels4)
    assert jnp.allclose(loss4, ref4, rtol=1e-4, atol=1e-4), (loss4, ref4)

    print("KERNEL_OK")
</pallas_src>

<mosaic_0001>
module attributes {stable_mosaic.version = 11 : i64} {
  func.func @_ce_kernel(%arg0: i32, %arg1: i32, %arg2: memref<8x128xf32, #tpu.memory_space<vmem>>, %arg3: memref<8x1xi32, #tpu.memory_space<vmem>>, %arg4: memref<8x128xf32, #tpu.memory_space<vmem>>, %arg5: memref<8x1xf32, #tpu.memory_space<vmem>>, %arg6: memref<8x1xf32, #tpu.memory_space<vmem>>, %arg7: memref<8x1xf32, #tpu.memory_space<vmem>>) attributes {dimension_semantics = [#tpu.dimension_semantics<parallel>, #tpu.dimension_semantics<arbitrary>], iteration_bounds = array<i64: 2, 1>, scalar_prefetch = 0 : i64, scratch_operands = 3 : i64, tpu.core_type = #tpu.core_type<tc>, window_params = [{transform_indices = @transform_0, window_bounds = array<i64: 8, 128>}, {transform_indices = @transform_1, window_bounds = array<i64: 8, 1>}, {transform_indices = @transform_2, window_bounds = array<i64: 8, 128>}]} {
    %c0_i32 = arith.constant 0 : i32
    %0 = arith.cmpi eq, %arg1, %c0_i32 : i32
    %1 = arith.extui %0 : i1 to i32
    %c0_i32_0 = arith.constant 0 : i32
    %2 = arith.cmpi ne, %1, %c0_i32_0 : i32
    scf.if %2 {
      %cst_21 = arith.constant 0xFF800000 : f32
      %37 = vector.broadcast %cst_21 : f32 to vector<8x1xf32>
      %c0_22 = arith.constant 0 : index
      %c0_23 = arith.constant 0 : index
      %38 = vector.load %arg5[%c0_22, %c0_23] : memref<8x1xf32, #tpu.memory_space<vmem>>, vector<8x1xf32>
      tpu.vector_store %arg5[%c0_22, %c0_23], %37 {strides = array<i32>} : memref<8x1xf32, #tpu.memory_space<vmem>>, vector<8x1xf32>,
      %cst_24 = arith.constant 0.000000e+00 : f32
      %39 = vector.broadcast %cst_24 : f32 to vector<8x1xf32>
      %c0_25 = arith.constant 0 : index
      %c0_26 = arith.constant 0 : index
      %40 = vector.load %arg6[%c0_25, %c0_26] : memref<8x1xf32, #tpu.memory_space<vmem>>, vector<8x1xf32>
      tpu.vector_store %arg6[%c0_25, %c0_26], %39 {strides = array<i32>} : memref<8x1xf32, #tpu.memory_space<vmem>>, vector<8x1xf32>,
      %cst_27 = arith.constant 0.000000e+00 : f32
      %41 = vector.broadcast %cst_27 : f32 to vector<8x1xf32>
      %c0_28 = arith.constant 0 : index
      %c0_29 = arith.constant 0 : index
      %42 = vector.load %arg7[%c0_28, %c0_29] : memref<8x1xf32, #tpu.memory_space<vmem>>, vector<8x1xf32>
      tpu.vector_store %arg7[%c0_28, %c0_29], %41 {strides = array<i32>} : memref<8x1xf32, #tpu.memory_space<vmem>>, vector<8x1xf32>,
    } else {
    }
    %c0 = arith.constant 0 : index
    %c0_1 = arith.constant 0 : index
    %3 = vector.load %arg2[%c0, %c0_1] : memref<8x128xf32, #tpu.memory_space<vmem>>, vector<8x128xf32>
    %c0_2 = arith.constant 0 : index
    %c0_3 = arith.constant 0 : index
    %4 = vector.load %arg3[%c0_2, %c0_3] : memref<8x1xi32, #tpu.memory_space<vmem>>, vector<8x1xi32>
    %5 = tpu.iota {dimensions = array<i32: 1>} : vector<8x128xi32>
    %c128_i32 = arith.constant 128 : i32
    %6 = arith.muli %arg1, %c128_i32 : i32
    %7 = vector.broadcast %6 : i32 to vector<8x1xi32>
    %8 = arith.subi %4, %7 : vector<8x1xi32>
    %c0_4 = arith.constant 0 : index
    %c0_5 = arith.constant 0 : index
    %9 = vector.load %arg7[%c0_4, %c0_5] : memref<8x1xf32, #tpu.memory_space<vmem>>, vector<8x1xf32>
    %10 = vector.broadcast %8 : vector<8x1xi32> to vector<8x128xi32>
    %11 = arith.cmpi eq, %5, %10 : vector<8x128xi32>
    %cst = arith.constant 0.000000e+00 : f32
    %12 = vector.broadcast %cst : f32 to vector<8x128xf32>
    %13 = arith.select %11, %3, %12 : vector<8x128xi1>, vector<8x128xf32>
    %cst_6 = arith.constant dense<0.000000e+00> : vector<8xf32>
    %14 = vector.multi_reduction <add>, %13, %cst_6 [1] : vector<8x128xf32> to vector<8xf32>
    %15 = vector.shape_cast %14 : vector<8xf32> to vector<8x1xf32>
    %16 = arith.addf %9, %15 : vector<8x1xf32>
    %c0_7 = arith.constant 0 : index
    %c0_8 = arith.constant 0 : index
    %17 = vector.load %arg7[%c0_7, %c0_8] : memref<8x1xf32, #tpu.memory_space<vmem>>, vector<8x1xf32>
    tpu.vector_store %arg7[%c0_7, %c0_8], %16 {strides = array<i32>} : memref<8x1xf32, #tpu.memory_space<vmem>>, vector<8x1xf32>,
    %c0_9 = arith.constant 0 : index
    %c0_10 = arith.constant 0 : index
    %18 = vector.load %arg5[%c0_9, %c0_10] : memref<8x1xf32, #tpu.memory_space<vmem>>, vector<8x1xf32>
    %cst_11 = arith.constant dense<0xFF800000> : vector<8xf32>
    %19 = vector.multi_reduction <maximumf>, %3, %cst_11 [1] : vector<8x128xf32> to vector<8xf32>
    %20 = vector.shape_cast %19 : vector<8xf32> to vector<8x1xf32>
    %21 = arith.maximumf %18, %20 : vector<8x1xf32>
    %c0_12 = arith.constant 0 : index
    %c0_13 = arith.constant 0 : index
    %22 = vector.load %arg6[%c0_12, %c0_13] : memref<8x1xf32, #tpu.memory_space<vmem>>, vector<8x1xf32>
    %23 = arith.subf %18, %21 : vector<8x1xf32>
    %24 = math.exp %23 : vector<8x1xf32>
    %25 = arith.mulf %22, %24 : vector<8x1xf32>
    %26 = vector.broadcast %21 : vector<8x1xf32> to vector<8x128xf32>
    %27 = arith.subf %3, %26 : vector<8x128xf32>
    %28 = math.exp %27 : vector<8x128xf32>
    %cst_14 = arith.constant dense<0.000000e+00> : vector<8xf32>
    %29 = vector.multi_reduction <add>, %28, %cst_14 [1] : vector<8x128xf32> to vector<8xf32>
    %30 = vector.shape_cast %29 : vector<8xf32> to vector<8x1xf32>
    %31 = arith.addf %25, %30 : vector<8x1xf32>
    %c0_15 = arith.constant 0 : index
    %c0_16 = arith.constant 0 : index
    %32 = vector.load %arg6[%c0_15, %c0_16] : memref<8x1xf32, #tpu.memory_space<vmem>>, vector<8x1xf32>
    tpu.vector_store %arg6[%c0_15, %c0_16], %31 {strides = array<i32>} : memref<8x1xf32, #tpu.memory_space<vmem>>, vector<8x1xf32>,
    %c0_17 = arith.constant 0 : index
    %c0_18 = arith.constant 0 : index
    %33 = vector.load %arg5[%c0_17, %c0_18] : memref<8x1xf32, #tpu.memory_space<vmem>>, vector<8x1xf32>
    tpu.vector_store %arg5[%c0_17, %c0_18], %21 {strides = array<i32>} : memref<8x1xf32, #tpu.memory_space<vmem>>, vector<8x1xf32>,
    %c0_i32_19 = arith.constant 0 : i32
    %34 = arith.cmpi eq, %arg1, %c0_i32_19 : i32
    %35 = arith.extui %34 : i1 to i32
    %c0_i32_20 = arith.constant 0 : i32
    %36 = arith.cmpi ne, %35, %c0_i32_20 : i32
    scf.if %36 {
      %c-100_i32 = arith.constant -100 : i32
      %37 = vector.broadcast %c-100_i32 : i32 to vector<8x1xi32>
      %38 = arith.cmpi ne, %4, %37 : vector<8x1xi32>
      %c0_21 = arith.constant 0 : index
      %c0_22 = arith.constant 0 : index
      %39 = vector.load %arg5[%c0_21, %c0_22] : memref<8x1xf32, #tpu.memory_space<vmem>>, vector<8x1xf32>
      %c0_23 = arith.constant 0 : index
      %c0_24 = arith.constant 0 : index
      %40 = vector.load %arg6[%c0_23, %c0_24] : memref<8x1xf32, #tpu.memory_space<vmem>>, vector<8x1xf32>
      %41 = math.log %40 : vector<8x1xf32>
      %42 = arith.addf %39, %41 : vector<8x1xf32>
      %c0_25 = arith.constant 0 : index
      %c0_26 = arith.constant 0 : index
      %43 = vector.load %arg7[%c0_25, %c0_26] : memref<8x1xf32, #tpu.memory_space<vmem>>, vector<8x1xf32>
      %44 = arith.subf %42, %43 : vector<8x1xf32>
      %cst_27 = arith.constant 0.000000e+00 : f32
      %45 = vector.broadcast %cst_27 : f32 to vector<8x1xf32>
      %46 = arith.select %38, %44, %45 : vector<8x1xi1>, vector<8x1xf32>
      %47 = vector.shape_cast %46 : vector<8x1xf32> to vector<1x8x1xf32>
      %cst_28 = arith.constant dense<0.000000e+00> : vector<1xf32>
      %48 = vector.multi_reduction <add>, %47, %cst_28 [1, 2] : vector<1x8x1xf32> to vector<1xf32>
      %49 = vector.shape_cast %48 : vector<1xf32> to vector<1x1x1xf32>
      %50 = vector.extract %49[0, 0, 0] : f32 from vector<1x1x1xf32>
      %51 = vector.broadcast %50 : f32 to vector<1x1xf32>
      %52 = vector.shape_cast %51 : vector<1x1xf32> to vector<1x1xf32>
      %53 = vector.broadcast %52 : vector<1x1xf32> to vector<8x128xf32>
      %c0_29 = arith.constant 0 : index
      %c0_30 = arith.constant 0 : index
      %54 = vector.load %arg4[%c0_29, %c0_30] : memref<8x128xf32, #tpu.memory_space<vmem>>, vector<8x128xf32>
      tpu.vector_store %arg4[%c0_29, %c0_30], %53 {strides = array<i32>} : memref<8x128xf32, #tpu.memory_space<vmem>>, vector<8x128xf32>,
    } else {
    }
    return
  }
  func.func @transform_0(%arg0: i32, %arg1: i32) -> (i32, i32) {
    %c0_i32 = arith.constant 0 : i32
    return %arg0, %arg1 : i32, i32
  }
  func.func @transform_1(%arg0: i32, %arg1: i32) -> (i32, i32) {
    %c0_i32 = arith.constant 0 : i32
    %c0_i32_0 = arith.constant 0 : i32
    return %arg0, %c0_i32 : i32, i32
  }
  func.func @transform_2(%arg0: i32, %arg1: i32) -> (i32, i32) {
    %c0_i32 = arith.constant 0 : i32
    %c0_i32_0 = arith.constant 0 : i32
    return %arg0, %c0_i32 : i32, i32
  }
}

</mosaic_0001>

<llo_original>
// kernel: lm_loss.1
$region0: #{lm_loss.1}
  #allocation0 [shape = 'u32[]', space=smem, size = 0x4, offset = 0x4, fixed_abs, tag = 'smem constant byte address 0x4 - core index']
  #allocation1 [shape = 'u32[144,128]{1,0:T(1,128)}', space=vmem, size = 0x12000, scoped, tag = 'internal scratch']
  #allocation2 [shape = 'f32[8,1]{1,0:T(8,128)}', space=vmem, size = 0x1000, scoped, tag = 'scratch operand']
  #allocation3 [shape = 'f32[8,1]{1,0:T(8,128)}', space=vmem, size = 0x1000, scoped, tag = 'scratch operand']
  #allocation4 [shape = 'f32[8,1]{1,0:T(8,128)}', space=vmem, size = 0x1000, scoped, tag = 'scratch operand']
  %s0 = inlined_call_operand.vmem [shape: f32[16,128], index: 0, kind: input, shape index: {}]
  %s1 = inlined_call_operand.vmem [shape: s32[16,1], index: 1, kind: input, shape index: {}]
  %s2 = inlined_call_operand.vmem [shape: f32[16,128], index: 2, kind: output, shape index: {}]
  %s3 = sld [smem:[#allocation0]]
  $region49: #{lm_loss.1} parent=0
    _
  %s5 = ssub.s32 1, %s3
  %s6 = scalar_select 0, %s5, %s3
  loop: start=0, step=1, limit=4
  $region2: #{lm_loss.1} parent=0 // loop_pre_header
    _
  $region3: #{lm_loss.1} parent=0 // loop_header
    %s8 = sphi 0, %s12
    %p9 = scmp.ge.s32.totalorder %s8, 4
    %s15 = sphi 0, %s27
    %s16 = sphi 0, %s23
    %s17 = sphi 0, %s15
    %s18 = sphi 0, %s16
    %s19 = sphi 0, %s17
    %s20 = sphi 0, %s18
    %s32 = sphi 0, %s34
    %s35 = sphi 0, %s32
    %s36 = sphi 0, %s35
    %s52 = sphi 0, %s36
    %s58 = sphi 0, %s60
    %s61 = sphi 0, %s58
    %s62 = sphi 0, %s61
    %s78 = sphi 0, %s62
    %s84 = sphi 0, %s86
    %s87 = sphi 0, %s84
    %s88 = sphi 0, %s87
    %s104 = sphi 0, %s88
  $region4: #{lm_loss.1} parent=0 // loop_header_branch
    %11 = sbr.rel (%p9) target = $region8
  $region5: #{lm_loss.1} parent=0 // loop_body
    %s13 = ssub.s32 %s8, 1
    %s14 = ssub.s32 %s8, 2
    %s21 = sadd.s32 1, %s16
    %p22 = scmp.ge.s32.totalorder %s21, 1
    %s23 = scalar_select %p22, 0, %s21
    %s24 = sadd.s32 1, %s15
    %s25 = scalar_select %p22, %s24, %s15
    %p26 = scmp.ge.s32.totalorder %s25, 2
    %s27 = scalar_select %p26, 0, %s25
    %s28 = ssub.s32 %s15, %s27
    %s29 = ssub.s32 %s16, %s23
    %s30 = sor.u32 %s28, %s29
    %p31 = scmp.eq.s32.totalorder %s30, 0
    %s33 = sadd.s32 %s32, 1
    %s34 = scalar_select %p31, %s32, %s33
    %p37 = pneg %p31
    %p38 = scmp.eq.s32.totalorder %s8, 1
    %p39 = por %p37, %p38
    %p40 = scmp.ne.s32.totalorder %s32, %s35
    %p41 = scmp.eq.s32.totalorder %s8, 0
    %p42 = por %p40, %p41
    %p43 = scmp.ne.s32.totalorder %s32, %s35
    %p44 = scmp.eq.s32.totalorder %s13, 1
    %p45 = por %p43, %p44
    %p46 = scmp.ne.s32.totalorder %s35, %s36
    %p47 = scmp.eq.s32.totalorder %s13, 0
    %p48 = por %p46, %p47
    %p49 = scmp.ne.s32.totalorder %s35, %s36
    %p50 = scmp.eq.s32.totalorder %s14, 1
    %p51 = por %p49, %p50
    %p53 = scmp.ne.s32.totalorder %s36, %s52
    %p54 = scmp.eq.s32.totalorder %s14, 0
    %p55 = por %p53, %p54
    %s56 = ssub.s32 %s15, %s27
    %p57 = scmp.eq.s32.totalorder %s56, 0
    %s59 = sadd.s32 %s58, 1
    %s60 = scalar_select %p57, %s58, %s59
    %p63 = pneg %p57
    %p64 = scmp.eq.s32.totalorder %s8, 1
    %p65 = por %p63, %p64
    %p66 = scmp.ne.s32.totalorder %s58, %s61
    %p67 = scmp.eq.s32.totalorder %s8, 0
    %p68 = por %p66, %p67
    %p69 = scmp.ne.s32.totalorder %s58, %s61
    %p70 = scmp.eq.s32.totalorder %s13, 1
    %p71 = por %p69, %p70
    %p72 = scmp.ne.s32.totalorder %s61, %s62
    %p73 = scmp.eq.s32.totalorder %s13, 0
    %p74 = por %p72, %p73
    %p75 = scmp.ne.s32.totalorder %s61, %s62
    %p76 = scmp.eq.s32.totalorder %s14, 1
    %p77 = por %p75, %p76
    %p79 = scmp.ne.s32.totalorder %s62, %s78
    %p80 = scmp.eq.s32.totalorder %s14, 0
    %p81 = por %p79, %p80
    %s82 = ssub.s32 %s15, %s27
    %p83 = scmp.eq.s32.totalorder %s82, 0
    %s85 = sadd.s32 %s84, 1
    %s86 = scalar_select %p83, %s84, %s85
    %p89 = pneg %p83
    %p90 = scmp.eq.s32.totalorder %s8, 1
    %p91 = por %p89, %p90
    %p92 = scmp.ne.s32.totalorder %s84, %s87
    %p93 = scmp.eq.s32.totalorder %s8, 0
    %p94 = por %p92, %p93
    %p95 = scmp.ne.s32.totalorder %s84, %s87
    %p96 = scmp.eq.s32.totalorder %s13, 1
    %p97 = por %p95, %p96
    %p98 = scmp.ne.s32.totalorder %s87, %s88
    %p99 = scmp.eq.s32.totalorder %s13, 0
    %p100 = por %p98, %p99
    %p101 = scmp.ne.s32.totalorder %s87, %s88
    %p102 = scmp.eq.s32.totalorder %s14, 1
    %p103 = por %p101, %p102
    %p105 = scmp.ne.s32.totalorder %s88, %s104
    %p106 = scmp.eq.s32.totalorder %s14, 0
    %p107 = por %p105, %p106
    %p108 = scmp.le.s32.totalorder 1, %s8
    %p109 = scmp.lt.s32.totalorder %s8, 3
    %p110 = pnand %p108, %p109
    %p111 = pneg %p110
    // Predicated region
    $region9: #{lm_loss.1} parent=5 // pred_check
      _
    $region10: #{lm_loss.1} parent=5 // pred_check_branch
      %113 = sbr.rel (%p110) target = $region12
    $region11: #{lm_loss.1} parent=5 // pred_region
      %s114 = ssub.s32 %s8, 1
    $region12: #{lm_loss.1} parent=5 // pred_fallthru
      _
    %p115 = scmp.lt.s32.totalorder %s8, 2
    // Predicated region
    $region13: #{lm_loss.1} parent=5 // pred_check
      %p116 = pneg %p115
    $region14: #{lm_loss.1} parent=5 // pred_check_branch
      %118 = sbr.rel (%p116) target = $region16
    $region15: #{lm_loss.1} parent=5 // pred_region
      // Predicated region
      $region17: #{lm_loss.1} parent=15 // pred_check
        %p119 = pneg %p42
      $region18: #{lm_loss.1} parent=15 // pred_check_branch
        %121 = sbr.rel (%p119) target = $region20
      $region19: #{lm_loss.1} parent=15 // pred_region
        %p122 = scmp.lt.s32.totalorder %s15, 1
        %s123 = scalar_select %p122, %s15, 1
        %p124 = scmp.lt.s32.totalorder %s16, 0
        %s125 = scalar_select %p124, %s16, 0
        %s126 = sadd.s32 %s125, %s123
        %s127 = smul.addr %s126, 8
        %s128 = scalar_lea.vmem %s0, %s127
      $region20: #{lm_loss.1} parent=15 // pred_fallthru
        _
      // Predicated region
      $region21: #{lm_loss.1} parent=15 // pred_check
        %p129 = pneg %p68
      $region22: #{lm_loss.1} parent=15 // pred_check_branch
        %131 = sbr.rel (%p129) target = $region24
      $region23: #{lm_loss.1} parent=15 // pred_region
        %p132 = scmp.lt.s32.totalorder %s15, 1
        %s133 = scalar_select %p132, %s15, 1
        %s134 = smul.addr %s133, 8
        %s135 = scalar_lea.vmem %s1, %s134
      $region24: #{lm_loss.1} parent=15 // pred_fallthru
        _
    $region16: #{lm_loss.1} parent=5 // pred_fallthru
      _
    %p136 = scmp.le.s32.totalorder 1, %s8
    %p137 = scmp.lt.s32.totalorder %s8, 3
    %p138 = pnand %p136, %p137
    %p139 = pneg %p138
    // Predicated region
    $region25: #{lm_loss.1} parent=5 // pred_check
      _
    $region26: #{lm_loss.1} parent=5 // pred_check_branch
      %141 = sbr.rel (%p138) target = $region28
    $region27: #{lm_loss.1} parent=5 // pred_region
      %s142 = ssub.s32 %s8, 1
      %p143 = scmp.lt.s32.totalorder %s17, 1
      %s144 = scalar_select %p143, %s17, 1
      %p145 = scmp.lt.s32.totalorder %s18, 0
      %s146 = scalar_select %p145, %s18, 0
      %s147 = sadd.s32 %s146, %s144
      %s148 = smul.addr %s147, 8
      %s149 = scalar_lea.vmem %s0, %s148
      %p150 = pneg %p48
      %p151 = pneg %p45
      %p152 = scmp.lt.s32.totalorder %s17, 1
      %s153 = scalar_select %p152, %s17, 1
      %s154 = smul.addr %s153, 8
      %s155 = scalar_lea.vmem %s1, %s154
      %p156 = pneg %p74
      %p157 = pneg %p71
      %p158 = pneg %p100
      %p159 = pneg %p97
      %p160 = scmp.lt.s32.totalorder %s17, 1
      %s161 = scalar_select %p160, %s17, 1
      %s162 = smul.addr %s161, 8
      %s163 = scalar_lea.vmem %s2, %s162
      %p164 = scmp.lt.s32.totalorder %s17, 1
      %s165 = scalar_select %p164, %s17, 1
      %p166 = scmp.lt.s32.totalorder %s18, 0
      %s167 = scalar_select %p166, %s18, 0
      %s168 = sadd.s32 %s167, %s165
      %s169 = smul.addr %s168, 8
      %s170 = scalar_lea.vmem %s0, %s169
      %p171 = scmp.lt.s32.totalorder %s17, 1
      %s172 = scalar_select %p171, %s17, 1
      %s173 = smul.addr %s172, 8
      %s174 = scalar_lea.vmem %s1, %s173
      %p175 = scmp.lt.s32.totalorder %s17, 1
      %s176 = scalar_select %p175, %s17, 1
      %s177 = smul.addr %s176, 8
      %s178 = scalar_lea.vmem %s2, %s177
      %p179 = scmp.eq.s32.totalorder %s18, 0
      // Predicated region
      $region29: #{lm_loss.1} parent=27 // pred_check
        %p180 = pneg %p179
      $region30: #{lm_loss.1} parent=27 // pred_check_branch
        %182 = sbr.rel (%p180) target = $region32
      $region31: #{lm_loss.1} parent=27 // pred_region
        %vm183 = vcmask 7168
        %184 = vst.msk [vmem:[#allocation2] sm:$0xff] %vm183, -inf
        %185 = vst.msk [vmem:[#allocation3] sm:$0xff] %vm183, 0.0
        %186 = vst.msk [vmem:[#allocation4] sm:$0xff] %vm183, 0.0
      $region32: #{lm_loss.1} parent=27 // pred_fallthru
        _
      %v187 = vld [vmem:[%s170] sm:$0xff]
      %v188 = vld [vmem:[%s174] sm:$0xff]
      %v189 = vlaneseq
      %v190 = vand.u32 %v189, 127
      %s191 = smul.u32 %s18, 128
      %v192 = vstv %s191
      %v193 = vsub.s32 %v188, %v192
      %v194 = vld [vmem:[#allocation4] sm:$0xff]
      %195 = vset.pattern.permute.xlu0 0
      %196 = vperm.xlu0 %195, %v193
      %v197 = vpop.permute.xlu0 %196
      %vm198 = vcmp.eq.s32.totalorder %v190, %v197
      %v199 = vsel %vm198, %v187, 0.0
      %200 = vadd.xlane.f32.xlu0 %v199
      %v201 = vpop.xlane.xlu0 %200
      %v202 = vadd.f32 %v194, %v201
      %vm203 = vcmask 7168
      %204 = vst.msk [vmem:[#allocation4] sm:$0xff] %vm203, %v202
      %v205 = vld [vmem:[#allocation2] sm:$0xff]
      %206 = vmax.xlane.f32.xlu0 %v187
      %v207 = vpop.xlane.xlu0 %206
      %v208 = vmax.f32 %v205, %v207
      %v209 = vld [vmem:[#allocation3] sm:$0xff]
      %v210 = vsub.f32 %v205, %v208
      %v211 = vmul.f32 %v210, 1.442695
      %v212 = vpow.pop %v211
      %v213 = vmul.f32 %v209, %v212
      %215 = vset.pattern.permute.xlu0 0
      %216 = vperm.xlu0 %215, %v208
      %v217 = vpop.permute.xlu0 %216
      %v219 = vsub.f32 %v187, %v217
      %v220 = vmul.f32 %v219, 1.442695
      %v221 = vpow.pop %v220
      %222 = vadd.xlane.f32.xlu0 %v221
      %v223 = vpop.xlane.xlu0 %222
      %v224 = vadd.f32 %v213, %v223
      %225 = vst.msk [vmem:[#allocation3] sm:$0xff] %vm203, %v224
      %226 = vst.msk [vmem:[#allocation2] sm:$0xff] %vm203, %v208
      // Predicated region
      $region33: #{lm_loss.1} parent=27 // pred_check
        %p227 = pneg %p179
      $region34: #{lm_loss.1} parent=27 // pred_check_branch
        %229 = sbr.rel (%p227) target = $region36
      $region35: #{lm_loss.1} parent=27 // pred_region
        %vm230 = vcmp.ne.s32.totalorder %v188, 4294967196
        %v231 = vld [vmem:[#allocation2] sm:$0xff]
        %v232 = vld [vmem:[#allocation3] sm:$0xff]
        %v233 = vlog2.pop %v232
        %v234 = vmul.f32 %v233, 0.6931472
        %v235 = vadd.f32 %v231, %v234
        %v236 = vld [vmem:[#allocation4] sm:$0xff]
        %v237 = vsub.f32 %v235, %v236
        %v238 = vsel %vm230, %v237, 0.0
        %v239 = vsel %vm203, %v238, 0.0
        %240 = vadd.xlane.f32.xlu0 %v239
        %v241 = vpop.xlane.xlu0 %240
        %v242 = vrot.slane %v241, 4
        %v243 = vadd.f32 %v241, %v242
        %v244 = vrot.slane %v243, 2
        %v245 = vadd.f32 %v243, %v244
        %v246 = vrot.slane %v245, 1
        %v247 = vadd.f32 %v245, %v246
        %s248 = vtos %v247
        %v249 = vstv %s248
        %250 = vst [vmem:[%s178] sm:$0xff] %v249
      $region36: #{lm_loss.1} parent=27 // pred_fallthru
        _
      %p251 = scmp.lt.s32.totalorder %s17, 1
      %s252 = scalar_select %p251, %s17, 1
      %s253 = smul.addr %s252, 8
      %s254 = scalar_lea.vmem %s2, %s253
      // Predicated region
      $region37: #{lm_loss.1} parent=27 // pred_check
        %p255 = pneg %p97
      $region38: #{lm_loss.1} parent=27 // pred_check_branch
        %257 = sbr.rel (%p255) target = $region40
      $region39: #{lm_loss.1} parent=27 // pred_region
        _
      $region40: #{lm_loss.1} parent=27 // pred_fallthru
        _
    $region28: #{lm_loss.1} parent=5 // pred_fallthru
      _
    %p258 = scmp.le.s32.totalorder 2, %s8
    // Predicated region
    $region41: #{lm_loss.1} parent=5 // pred_check
      %p259 = pneg %p258
    $region42: #{lm_loss.1} parent=5 // pred_check_branch
      %261 = sbr.rel (%p259) target = $region44
    $region43: #{lm_loss.1} parent=5 // pred_region
      %s262 = ssub.s32 %s8, 2
      // Predicated region
      $region45: #{lm_loss.1} parent=43 // pred_check
        %p263 = pneg %p103
      $region46: #{lm_loss.1} parent=43 // pred_check_branch
        %265 = sbr.rel (%p263) target = $region48
      $region47: #{lm_loss.1} parent=43 // pred_region
        %p266 = scmp.lt.s32.totalorder %s19, 1
        %s267 = scalar_select %p266, %s19, 1
        %s268 = smul.addr %s267, 8
        %s269 = scalar_lea.vmem %s2, %s268
      $region48: #{lm_loss.1} parent=43 // pred_fallthru
        _
    $region44: #{lm_loss.1} parent=5 // pred_fallthru
      _
  $region6: #{lm_loss.1} parent=0 // loop_footer
    %s12 = sadd.s32 1, %s8
  $region7: #{lm_loss.1} parent=0 // loop_footer_branch
    %7 = sbr.rel target = $region3
  $region8: #{lm_loss.1} parent=0 // loop_exit
    _

</llo_original>
